<compile_context>
chip_gen: v5e
topology: v5e:2x2
jax: 0.10.0
libtpu: 0.0.40
codegen_flags: <defaults>
</compile_context>

<pallas_src>
import functools

import jax
import jax.numpy as jnp
from jax.experimental import pallas as pl
from jax.experimental.pallas import tpu as pltpu

_EPS = 1e-5
_VMEM_LIMIT = 32 * 1024 * 1024


def _round_up(x, m):
    return (x + m - 1) // m * m


def _choose_row_tile(n_rows, width, *, target_tile_bytes=1 << 20, min_grid=8):
    """Sublane-aligned row-tile size, budgeted on the f32 compute footprint
    (kernel promotes to f32 regardless of input dtype).  ~0.5-1 MiB tiles sit
    at the HBM-roofline knee; keep >= min_grid steps so pipelining (and v7x
    megacore sharding) has work."""
    sub = 8
    if n_rows <= sub:
        return max(n_rows, 1)                     # full-extent block
    row_bytes_f32 = max(width * 4, 1)
    tm = max(sub, (target_tile_bytes // row_bytes_f32) // sub * sub)
    tm = min(tm, max(sub, _round_up(pl.cdiv(n_rows, min_grid), sub)))
    tm = min(tm, _round_up(n_rows, sub))
    return tm


def _seg_sum_exact(v, ones_bf16):
    """Segmented sum of f32 `v` (tm, W) against a 0/1 bf16 matrix, broadcast
    back to every lane of the segment.  hi/lo bf16 split keeps the sum
    accurate to ~2^-16 relative using two single-pass bf16 MXU matmuls."""
    hi = v.astype(jnp.bfloat16)
    lo = (v - hi.astype(jnp.float32)).astype(jnp.bfloat16)
    return (jnp.dot(hi, ones_bf16, preferred_element_type=jnp.float32)
            + jnp.dot(lo, ones_bf16, preferred_element_type=jnp.float32))


def _ln_packed_kernel(x_ref, w_ref, b_ref, m_ref, o_ref, *, inv_c, eps):
    # x_ref: (tm, W), W = G*C -- G original rows packed along lanes.
    # m_ref: (W, W) block-diagonal 0/1 bf16; one matmul both reduces per
    # segment and broadcasts the statistic to every lane of its segment.
    x = x_ref[...].astype(jnp.float32)
    m = m_ref[...]
    mu = _seg_sum_exact(x, m) * inv_c
    d = x - mu
    var = jnp.maximum(_seg_sum_exact(d * d, m) * inv_c, 0.0)   # unbiased=False
    y = d * jax.lax.rsqrt(var + eps)
    y = y * w_ref[...].astype(jnp.float32) + b_ref[...].astype(jnp.float32)
    o_ref[...] = y.astype(o_ref.dtype)


def _ln_rowreduce_kernel(x_ref, w_ref, b_ref, o_ref, *, inv_c, eps):
    # x_ref: (tm, C) tile of rows (C >= 128 path); w_ref/b_ref: (1, C).
    x = x_ref[...].astype(jnp.float32)
    mu = jnp.sum(x, axis=-1, keepdims=True) * inv_c
    d = x - mu
    var = jnp.sum(d * d, axis=-1, keepdims=True) * inv_c        # unbiased=False
    y = d * jax.lax.rsqrt(var + eps)
    y = y * w_ref[...].astype(jnp.float32) + b_ref[...].astype(jnp.float32)
    o_ref[...] = y.astype(o_ref.dtype)


def _rowreduce_call(x2, weight, bias, *, eps, target_tile_bytes):
    N, C = x2.shape
    itemsize = jnp.dtype(x2.dtype).itemsize
    w2 = weight.reshape(1, C).astype(jnp.float32)
    b2 = bias.reshape(1, C).astype(jnp.float32)
    tm = _choose_row_tile(N, C, target_tile_bytes=target_tile_bytes)
    grid = (pl.cdiv(N, tm),)
    kernel = functools.partial(_ln_rowreduce_kernel, inv_c=1.0 / C, eps=eps)
    return pl.pallas_call(
        kernel,
        out_shape=jax.ShapeDtypeStruct((N, C), x2.dtype),
        grid_spec=pltpu.PrefetchScalarGridSpec(
            num_scalar_prefetch=0,
            grid=grid,
            in_specs=[
                pl.BlockSpec((tm, C), lambda i: (i, 0)),
                pl.BlockSpec((1, C), lambda i: (0, 0)),
                pl.BlockSpec((1, C), lambda i: (0, 0)),
            ],
            out_specs=pl.BlockSpec((tm, C), lambda i: (i, 0)),
        ),
        compiler_params=pltpu.CompilerParams(
            dimension_semantics=("parallel",),
            vmem_limit_bytes=_VMEM_LIMIT,
        ),
        cost_estimate=pl.CostEstimate(
            flops=10 * N * C,
            transcendentals=N,
            bytes_accessed=2 * N * C * itemsize,
        ),
    )(x2, w2, b2)


def _packed_call(x2, weight, bias, G, *, eps, target_tile_bytes):
    N, C = x2.shape                                   # N % G == 0
    W = G * C
    itemsize = jnp.dtype(x2.dtype).itemsize
    n_rows = N // G
    xp = x2.reshape(n_rows, W)                        # contiguous -> free view
    wp = jnp.tile(weight.reshape(-1), G).reshape(1, W).astype(jnp.float32)
    bp = jnp.tile(bias.reshape(-1), G).reshape(1, W).astype(jnp.float32)
    seg = jnp.arange(W, dtype=jnp.int32) // C
    mseg = (seg[:, None] == seg[None, :]).astype(jnp.bfloat16)  # 0/1 exact in bf16

    tm = _choose_row_tile(n_rows, W, target_tile_bytes=target_tile_bytes)
    grid = (pl.cdiv(n_rows, tm),)
    kernel = functools.partial(_ln_packed_kernel, inv_c=1.0 / C, eps=eps)
    out = pl.pallas_call(
        kernel,
        out_shape=jax.ShapeDtypeStruct((n_rows, W), x2.dtype),
        grid_spec=pltpu.PrefetchScalarGridSpec(
            num_scalar_prefetch=0,
            grid=grid,
            in_specs=[
                pl.BlockSpec((tm, W), lambda i: (i, 0)),
                pl.BlockSpec((1, W), lambda i: (0, 0)),
                pl.BlockSpec((1, W), lambda i: (0, 0)),
                pl.BlockSpec((W, W), lambda i: (0, 0)),   # constant block: DMA'd once
            ],
            out_specs=pl.BlockSpec((tm, W), lambda i: (i, 0)),
        ),
        compiler_params=pltpu.CompilerParams(
            dimension_semantics=("parallel",),
            vmem_limit_bytes=_VMEM_LIMIT,
        ),
        cost_estimate=pl.CostEstimate(
            flops=n_rows * W * (8 * W + 16),   # 4 bf16 MXU passes + elementwise
            transcendentals=n_rows * W,
            bytes_accessed=2 * N * C * itemsize,
        ),
    )(xp, wp, bp, mseg)
    return out.reshape(N, C)                          # contiguous -> free view


def withbias_layernorm(x, weight, bias, *, eps=_EPS, target_tile_bytes=1 << 20):
    """x: (..., C); weight, bias: (C,). Returns same shape/dtype as x."""
    orig_shape = x.shape
    C = orig_shape[-1]
    x2 = x.reshape(-1, C)
    N = x2.shape[0]

    # Lane-pack G rows per kernel row when C < 128 (lane-dense loads/stores).
    G = max(1, 128 // C) if C < 128 else 1

    if G > 1:
        if N % G == 0:
            # Hot path (typical MSCA shapes): packing is a free reshape,
            # no pad / slice copies.
            out = _packed_call(x2, weight, bias, G, eps=eps,
                               target_tile_bytes=target_tile_bytes)
        else:
            # Rare ragged case: pad to a packable row count, slice back.
            # (Padded rows are independent garbage and get discarded; a
            # zero-copy alternative would move the same extra HBM traffic.)
            Np = _round_up(N, G)
            xpad = jnp.pad(x2, ((0, Np - N), (0, 0)))
            out = _packed_call(xpad, weight, bias, G, eps=eps,
                               target_tile_bytes=target_tile_bytes)[:N]
        return out.reshape(orig_shape)

    # C >= 128: rows are already lane-dense; plain per-row reduction.
    out = _rowreduce_call(x2, weight, bias, eps=eps,
                          target_tile_bytes=target_tile_bytes)
    return out.reshape(orig_shape)


def _reference(x, weight, bias):
    x32 = x.astype(jnp.float32)
    mu = jnp.mean(x32, axis=-1, keepdims=True)
    var = jnp.mean((x32 - mu) ** 2, axis=-1, keepdims=True)
    return ((x32 - mu) / jnp.sqrt(var + _EPS) * weight + bias).astype(x.dtype)


def _check(x, weight, bias):
    out = jax.block_until_ready(withbias_layernorm(x, weight, bias))
    ref = _reference(x, weight, bias)
    assert out.shape == x.shape and out.dtype == x.dtype
    err = float(jnp.max(jnp.abs(out.astype(jnp.float32) - ref.astype(jnp.float32))))
    assert jnp.allclose(out, ref, atol=1e-4, rtol=1e-4), err


if __name__ == "__main__":
    key = jax.random.PRNGKey(0)
    kx, kw, kb, kx2, kx3, kx4 = jax.random.split(key, 6)

    # Main case: (B, H*W, C) tokens, normalized over C (lane-packed, C < 128).
    B, H, Wsp, C = 2, 16, 16, 32
    x = jax.random.normal(kx, (B, H * Wsp, C), dtype=jnp.float32)
    weight = 1.0 + 0.1 * jax.random.normal(kw, (C,), dtype=jnp.float32)
    bias = 0.1 * jax.random.normal(kb, (C,), dtype=jnp.float32)
    _check(x, weight, bias)

    # Token count not divisible by the row tile (exercises the cdiv grid).
    x_odd = jax.random.normal(kx2, (2, 100, C), dtype=jnp.float32)
    _check(x_odd, weight, bias)

    # Token count not divisible by G (exercises the ragged fallback).
    x_rag = jax.random.normal(kx3, (1, 37, C), dtype=jnp.float32)
    _check(x_rag, weight, bias)

    # Wide-channel case (C >= 128 -> plain row-reduction path).
    Cw = 128
    x_wide = jax.random.normal(kx4, (2, 64, Cw), dtype=jnp.float32)
    _check(x_wide, jnp.ones((Cw,), jnp.float32), jnp.zeros((Cw,), jnp.float32))

    print("KERNEL_OK")
</pallas_src>

<mosaic_0001>
module attributes {stable_mosaic.version = 11 : i64} {
  func.func @_ln_packed_kernel(%arg0: i32, %arg1: memref<16x128xf32, #tpu.memory_space<vmem>>, %arg2: memref<1x128xf32, #tpu.memory_space<vmem>>, %arg3: memref<1x128xf32, #tpu.memory_space<vmem>>, %arg4: memref<128x128xbf16, #tpu.memory_space<vmem>>, %arg5: memref<16x128xf32, #tpu.memory_space<vmem>>) attributes {dimension_semantics = [#tpu.dimension_semantics<parallel>], iteration_bounds = array<i64: 8>, scalar_prefetch = 0 : i64, scratch_operands = 0 : i64, tpu.core_type = #tpu.core_type<tc>, window_params = [{transform_indices = @transform_0, window_bounds = array<i64: 16, 128>}, {pipeline_mode = #tpu.pipeline_mode<synchronous>, transform_indices = @transform_1, window_bounds = array<i64: 1, 128>}, {pipeline_mode = #tpu.pipeline_mode<synchronous>, transform_indices = @transform_2, window_bounds = array<i64: 1, 128>}, {pipeline_mode = #tpu.pipeline_mode<synchronous>, transform_indices = @transform_3, window_bounds = array<i64: 128, 128>}, {transform_indices = @transform_4, window_bounds = array<i64: 16, 128>}]} {
    %c0 = arith.constant 0 : index
    %c0_0 = arith.constant 0 : index
    %0 = vector.load %arg1[%c0, %c0_0] : memref<16x128xf32, #tpu.memory_space<vmem>>, vector<16x128xf32>
    %c0_1 = arith.constant 0 : index
    %c0_2 = arith.constant 0 : index
    %1 = vector.load %arg4[%c0_1, %c0_2] : memref<128x128xbf16, #tpu.memory_space<vmem>>, vector<128x128xbf16>
    %2 = arith.truncf %0 : vector<16x128xf32> to vector<16x128xbf16>
    %3 = arith.extf %2 : vector<16x128xbf16> to vector<16x128xf32>
    %4 = arith.subf %0, %3 : vector<16x128xf32>
    %5 = arith.truncf %4 : vector<16x128xf32> to vector<16x128xbf16>
    %cst = arith.constant dense<0.000000e+00> : vector<16x128xf32>
    %6 = tpu.matmul %2, %1, %cst {dimension_numbers = #tpu.dot_dimension_numbers<[1], [0], [0], [1], [0, 0, 1, 1], [], []>} : vector<16x128xbf16>, vector<128x128xbf16>, vector<16x128xf32> -> vector<16x128xf32>
    %cst_3 = arith.constant dense<0.000000e+00> : vector<16x128xf32>
    %7 = tpu.matmul %5, %1, %cst_3 {dimension_numbers = #tpu.dot_dimension_numbers<[1], [0], [0], [1], [0, 0, 1, 1], [], []>} : vector<16x128xbf16>, vector<128x128xbf16>, vector<16x128xf32> -> vector<16x128xf32>
    %8 = arith.addf %6, %7 : vector<16x128xf32>
    %cst_4 = arith.constant 3.125000e-02 : f32
    %9 = vector.broadcast %cst_4 : f32 to vector<16x128xf32>
    %10 = arith.mulf %8, %9 : vector<16x128xf32>
    %11 = arith.subf %0, %10 : vector<16x128xf32>
    %12 = arith.mulf %11, %11 : vector<16x128xf32>
    %13 = arith.truncf %12 : vector<16x128xf32> to vector<16x128xbf16>
    %14 = arith.extf %13 : vector<16x128xbf16> to vector<16x128xf32>
    %15 = arith.subf %12, %14 : vector<16x128xf32>
    %16 = arith.truncf %15 : vector<16x128xf32> to vector<16x128xbf16>
    %cst_5 = arith.constant dense<0.000000e+00> : vector<16x128xf32>
    %17 = tpu.matmul %13, %1, %cst_5 {dimension_numbers = #tpu.dot_dimension_numbers<[1], [0], [0], [1], [0, 0, 1, 1], [], []>} : vector<16x128xbf16>, vector<128x128xbf16>, vector<16x128xf32> -> vector<16x128xf32>
    %cst_6 = arith.constant dense<0.000000e+00> : vector<16x128xf32>
    %18 = tpu.matmul %16, %1, %cst_6 {dimension_numbers = #tpu.dot_dimension_numbers<[1], [0], [0], [1], [0, 0, 1, 1], [], []>} : vector<16x128xbf16>, vector<128x128xbf16>, vector<16x128xf32> -> vector<16x128xf32>
    %19 = arith.addf %17, %18 : vector<16x128xf32>
    %cst_7 = arith.constant 3.125000e-02 : f32
    %20 = vector.broadcast %cst_7 : f32 to vector<16x128xf32>
    %21 = arith.mulf %19, %20 : vector<16x128xf32>
    %cst_8 = arith.constant 0.000000e+00 : f32
    %22 = vector.broadcast %cst_8 : f32 to vector<16x128xf32>
    %23 = arith.maximumf %21, %22 : vector<16x128xf32>
    %cst_9 = arith.constant 9.99999974E-6 : f32
    %24 = vector.broadcast %cst_9 : f32 to vector<16x128xf32>
    %25 = arith.addf %23, %24 : vector<16x128xf32>
    %26 = math.rsqrt %25 : vector<16x128xf32>
    %27 = arith.mulf %11, %26 : vector<16x128xf32>
    %c0_10 = arith.constant 0 : index
    %c0_11 = arith.constant 0 : index
    %28 = vector.load %arg2[%c0_10, %c0_11] : memref<1x128xf32, #tpu.memory_space<vmem>>, vector<1x128xf32>
    %29 = vector.broadcast %28 : vector<1x128xf32> to vector<16x128xf32>
    %30 = arith.mulf %27, %29 : vector<16x128xf32>
    %c0_12 = arith.constant 0 : index
    %c0_13 = arith.constant 0 : index
    %31 = vector.load %arg3[%c0_12, %c0_13] : memref<1x128xf32, #tpu.memory_space<vmem>>, vector<1x128xf32>
    %32 = vector.broadcast %31 : vector<1x128xf32> to vector<16x128xf32>
    %33 = arith.addf %30, %32 : vector<16x128xf32>
    %c0_14 = arith.constant 0 : index
    %c0_15 = arith.constant 0 : index
    %34 = vector.load %arg5[%c0_14, %c0_15] : memref<16x128xf32, #tpu.memory_space<vmem>>, vector<16x128xf32>
    tpu.vector_store %arg5[%c0_14, %c0_15], %33 {strides = array<i32>} : memref<16x128xf32, #tpu.memory_space<vmem>>, vector<16x128xf32>,
    return
  }
  func.func @transform_0(%arg0: i32) -> (i32, i32) {
    %c0_i32 = arith.constant 0 : i32
    %c0_i32_0 = arith.constant 0 : i32
    return %arg0, %c0_i32 : i32, i32
  }
  func.func @transform_1(%arg0: i32) -> (i32, i32) {
    %c0_i32 = arith.constant 0 : i32
    %c0_i32_0 = arith.constant 0 : i32
    %c0_i32_1 = arith.constant 0 : i32
    return %c0_i32, %c0_i32_0 : i32, i32
  }
  func.func @transform_2(%arg0: i32) -> (i32, i32) {
    %c0_i32 = arith.constant 0 : i32
    %c0_i32_0 = arith.constant 0 : i32
    %c0_i32_1 = arith.constant 0 : i32
    return %c0_i32, %c0_i32_0 : i32, i32
  }
  func.func @transform_3(%arg0: i32) -> (i32, i32) {
    %c0_i32 = arith.constant 0 : i32
    %c0_i32_0 = arith.constant 0 : i32
    %c0_i32_1 = arith.constant 0 : i32
    return %c0_i32, %c0_i32_0 : i32, i32
  }
  func.func @transform_4(%arg0: i32) -> (i32, i32) {
    %c0_i32 = arith.constant 0 : i32
    %c0_i32_0 = arith.constant 0 : i32
    return %arg0, %c0_i32 : i32, i32
  }
}

</mosaic_0001>

<llo_original>
// kernel: tpu_custom_call.1
$region0: #{tpu_custom_call.1}
  #allocation0 [shape = 'u32[]', space=smem, size = 0x4, offset = 0x4, fixed_abs, tag = 'smem constant byte address 0x4 - core index']
  #allocation1 [shape = 'u32[72,128]{1,0:T(1,128)}', space=vmem, size = 0x9000, scoped, tag = 'internal scratch']
  %s0 = inlined_call_operand.hbm [shape: f32[128,128], index: 0, kind: input, shape index: {}]
  %s1 = inlined_call_operand.hbm [shape: f32[1,128], index: 1, kind: input, shape index: {}]
  %s2 = inlined_call_operand.vmem [shape: f32[1,128], index: 2, kind: input, shape index: {}]
  %s3 = inlined_call_operand.hbm [shape: bf16[128,128], index: 3, kind: input, shape index: {}]
  %s4 = inlined_call_operand.hbm [shape: f32[128,128], index: 4, kind: output, shape index: {}]
  %s5 = sld [smem:[#allocation0]]
  $region61: #{tpu_custom_call.1} parent=0
    _
  %s7 = ssub.s32 1, %s5
  %s8 = scalar_select 0, %s7, %s5
  $region1: #{tpu_custom_call.1} parent=0
    #allocation2 [shape = 'u8[16384]{0}', space=vmem, size = 0x4000, scoped, tag = 'input window, operand 0']
    #allocation3 [shape = 's32[2]{0}', space=sflag, size = 0x8, scoped, tag = 'scoped memory for tpu_custom_call.1']
    #allocation4 [shape = 's32[2]{0}', space=sflag, size = 0x8, scoped, tag = 'scoped memory for tpu_custom_call.1']
    #allocation5 [shape = 'u8[512]{0}', space=vmem, size = 0x400, scoped, tag = 'input window, operand 1, single buffered']
    #allocation6 [shape = 's32[1]{0}', space=sflag, size = 0x4, scoped, tag = 'scoped memory for tpu_custom_call.1']
    #allocation7 [shape = 'u8[32768]{0}', space=vmem, size = 0x8000, scoped, tag = 'input window, operand 3, single buffered']
    #allocation8 [shape = 'u8[16384]{0}', space=vmem, size = 0x4000, scoped, tag = 'output window, operand 0']
    %9 = vsyncpa [#allocation3], 0
    %s10 = scalar_lea.sflag [#allocation3], 1
    %11 = vsyncpa %s10, 0
    %12 = vsyncpa [#allocation6], 0
    %13 = vsyncpa [#allocation4], 0
    %s14 = scalar_lea.sflag [#allocation4], 1
    %15 = vsyncpa %s14, 0
    loop: start=0, step=1, limit=10
    $region2: #{tpu_custom_call.1} parent=1 // loop_pre_header
      _
    $region3: #{tpu_custom_call.1} parent=1 // loop_header
      %s17 = sphi 0, %s21
      %p18 = scmp.ge.s32.totalorder %s17, 10
      %s27 = sphi 0, %s29
      %s30 = sphi 0, %s27
      %s31 = sphi 0, %s30
      %s47 = sphi 0, %s31
      %s51 = sphi 0, %s51
      %s53 = sphi 0, %s51
      %s54 = sphi 0, %s53
      %s68 = sphi 0, %s54
      %s72 = sphi 0, %s72
      %s74 = sphi 0, %s72
      %s75 = sphi 0, %s74
      %s89 = sphi 0, %s75
      %s93 = sphi 0, %s93
      %s95 = sphi 0, %s93
      %s96 = sphi 0, %s95
      %s110 = sphi 0, %s96
      %s116 = sphi 0, %s118
      %s119 = sphi 0, %s116
      %s120 = sphi 0, %s119
      %s136 = sphi 0, %s120
    $region4: #{tpu_custom_call.1} parent=1 // loop_header_branch
      %20 = sbr.rel (%p18) target = $region8
    $region5: #{tpu_custom_call.1} parent=1 // loop_body
      %s22 = ssub.s32 %s17, 1
      %s23 = ssub.s32 %s17, 2
      %s24 = sadd.s32 %s17, 1
      %s25 = ssub.s32 %s17, %s24
      %p26 = scmp.eq.s32.totalorder %s25, 0
      %s28 = sadd.s32 %s27, 1
      %s29 = scalar_select %p26, %s27, %s28
      %p32 = pneg %p26
      %p33 = scmp.eq.s32.totalorder %s17, 7
      %p34 = por %p32, %p33
      %p35 = scmp.ne.s32.totalorder %s27, %s30
      %p36 = scmp.eq.s32.totalorder %s17, 0
      %p37 = por %p35, %p36
      %p38 = scmp.ne.s32.totalorder %s27, %s30
      %p39 = scmp.eq.s32.totalorder %s22, 7
      %p40 = por %p38, %p39
      %p41 = scmp.ne.s32.totalorder %s30, %s31
      %p42 = scmp.eq.s32.totalorder %s22, 0
      %p43 = por %p41, %p42
      %p44 = scmp.ne.s32.totalorder %s30, %s31
      %p45 = scmp.eq.s32.totalorder %s23, 7
      %p46 = por %p44, %p45
      %p48 = scmp.ne.s32.totalorder %s31, %s47
      %p49 = scmp.eq.s32.totalorder %s23, 0
      %p50 = por %p48, %p49
      %s52 = sadd.s32 %s51, 1
      %p55 = scmp.eq.s32.totalorder %s17, 7
      %p56 = scmp.ne.s32.totalorder %s51, %s53
      %p57 = scmp.eq.s32.totalorder %s17, 0
      %p58 = por %p56, %p57
      %p59 = scmp.ne.s32.totalorder %s51, %s53
      %p60 = scmp.eq.s32.totalorder %s22, 7
      %p61 = por %p59, %p60
      %p62 = scmp.ne.s32.totalorder %s53, %s54
      %p63 = scmp.eq.s32.totalorder %s22, 0
      %p64 = por %p62, %p63
      %p65 = scmp.ne.s32.totalorder %s53, %s54
      %p66 = scmp.eq.s32.totalorder %s23, 7
      %p67 = por %p65, %p66
      %p69 = scmp.ne.s32.totalorder %s54, %s68
      %p70 = scmp.eq.s32.totalorder %s23, 0
      %p71 = por %p69, %p70
      %s73 = sadd.s32 %s72, 1
      %p76 = scmp.eq.s32.totalorder %s17, 7
      %p77 = scmp.ne.s32.totalorder %s72, %s74
      %p78 = scmp.eq.s32.totalorder %s17, 0
      %p79 = por %p77, %p78
      %p80 = scmp.ne.s32.totalorder %s72, %s74
      %p81 = scmp.eq.s32.totalorder %s22, 7
      %p82 = por %p80, %p81
      %p83 = scmp.ne.s32.totalorder %s74, %s75
      %p84 = scmp.eq.s32.totalorder %s22, 0
      %p85 = por %p83, %p84
      %p86 = scmp.ne.s32.totalorder %s74, %s75
      %p87 = scmp.eq.s32.totalorder %s23, 7
      %p88 = por %p86, %p87
      %p90 = scmp.ne.s32.totalorder %s75, %s89
      %p91 = scmp.eq.s32.totalorder %s23, 0
      %p92 = por %p90, %p91
      %s94 = sadd.s32 %s93, 1
      %p97 = scmp.eq.s32.totalorder %s17, 7
      %p98 = scmp.ne.s32.totalorder %s93, %s95
      %p99 = scmp.eq.s32.totalorder %s17, 0
      %p100 = por %p98, %p99
      %p101 = scmp.ne.s32.totalorder %s93, %s95
      %p102 = scmp.eq.s32.totalorder %s22, 7
      %p103 = por %p101, %p102
      %p104 = scmp.ne.s32.totalorder %s95, %s96
      %p105 = scmp.eq.s32.totalorder %s22, 0
      %p106 = por %p104, %p105
      %p107 = scmp.ne.s32.totalorder %s95, %s96
      %p108 = scmp.eq.s32.totalorder %s23, 7
      %p109 = por %p107, %p108
      %p111 = scmp.ne.s32.totalorder %s96, %s110
      %p112 = scmp.eq.s32.totalorder %s23, 0
      %p113 = por %p111, %p112
      %s114 = ssub.s32 %s17, %s24
      %p115 = scmp.eq.s32.totalorder %s114, 0
      %s117 = sadd.s32 %s116, 1
      %s118 = scalar_select %p115, %s116, %s117
      %p121 = pneg %p115
      %p122 = scmp.eq.s32.totalorder %s17, 7
      %p123 = por %p121, %p122
      %p124 = scmp.ne.s32.totalorder %s116, %s119
      %p125 = scmp.eq.s32.totalorder %s17, 0
      %p126 = por %p124, %p125
      %p127 = scmp.ne.s32.totalorder %s116, %s119
      %p128 = scmp.eq.s32.totalorder %s22, 7
      %p129 = por %p127, %p128
      %p130 = scmp.ne.s32.totalorder %s119, %s120
      %p131 = scmp.eq.s32.totalorder %s22, 0
      %p132 = por %p130, %p131
      %p133 = scmp.ne.s32.totalorder %s119, %s120
      %p134 = scmp.eq.s32.totalorder %s23, 7
      %p135 = por %p133, %p134
      %p137 = scmp.ne.s32.totalorder %s120, %s136
      %p138 = scmp.eq.s32.totalorder %s23, 0
      %p139 = por %p137, %p138
      %p140 = scmp.le.s32.totalorder 1, %s17
      %p141 = scmp.lt.s32.totalorder %s17, 9
      %p142 = pnand %p140, %p141
      %p143 = pneg %p142
      // Predicated region
      $region9: #{tpu_custom_call.1} parent=5 // pred_check
        _
      $region10: #{tpu_custom_call.1} parent=5 // pred_check_branch
        %145 = sbr.rel (%p142) target = $region12
      $region11: #{tpu_custom_call.1} parent=5 // pred_region
        %s146 = ssub.s32 %s17, 1
        // Predicated region
        $region13: #{tpu_custom_call.1} parent=11 // pred_check
          %p147 = pneg %p64
        $region14: #{tpu_custom_call.1} parent=11 // pred_check_branch
          %149 = sbr.rel (%p147) target = $region16
        $region15: #{tpu_custom_call.1} parent=11 // pred_region
          %151 = vsyncadd [#allocation6], 0
          %s153 = sshll.u32 %s1, 4
          %s154 = int_to_ptr.hbm [resolvable:$true] %s153
          %s155 = sshll.u32 [#allocation5], 4
          %s156 = int_to_ptr.vmem [resolvable:$true] %s155
          %158 = dma.hbm_to_vmem [thread:$0]  %s154, 16, %s156, [#allocation6]
        $region16: #{tpu_custom_call.1} parent=11 // pred_fallthru
          _
        // Predicated region
        $region17: #{tpu_custom_call.1} parent=11 // pred_check
          %p159 = pneg %p85
        $region18: #{tpu_custom_call.1} parent=11 // pred_check_branch
          %161 = sbr.rel (%p159) target = $region20
        $region19: #{tpu_custom_call.1} parent=11 // pred_region
          _
        $region20: #{tpu_custom_call.1} parent=11 // pred_fallthru
          _
        // Predicated region
        $region21: #{tpu_custom_call.1} parent=11 // pred_check
          %p162 = pneg %p106
        $region22: #{tpu_custom_call.1} parent=11 // pred_check_branch
          %164 = sbr.rel (%p162) target = $region24
        $region23: #{tpu_custom_call.1} parent=11 // pred_region
          %166 = vsyncadd [#allocation6], 0
          %s167 = sshll.u32 %s3, 4
          %s168 = int_to_ptr.hbm [resolvable:$true] %s167
          %s169 = sshll.u32 [#allocation7], 4
          %s170 = int_to_ptr.vmem [resolvable:$true] %s169
          %175 = dma.hbm_to_vmem [thread:$0]  %s168, 1024, %s170, [#allocation6], 64, 64, 4
        $region24: #{tpu_custom_call.1} parent=11 // pred_fallthru
          _
      $region12: #{tpu_custom_call.1} parent=5 // pred_fallthru
        _
      %p176 = scmp.lt.s32.totalorder %s17, 8
      // Predicated region
      $region25: #{tpu_custom_call.1} parent=5 // pred_check
        %p177 = pneg %p176
      $region26: #{tpu_custom_call.1} parent=5 // pred_check_branch
        %179 = sbr.rel (%p177) target = $region28
      $region27: #{tpu_custom_call.1} parent=5 // pred_region
        // Predicated region
        $region29: #{tpu_custom_call.1} parent=27 // pred_check
          %p180 = pneg %p37
        $region30: #{tpu_custom_call.1} parent=27 // pred_check_branch
          %182 = sbr.rel (%p180) target = $region32
        $region31: #{tpu_custom_call.1} parent=27 // pred_region
          %s183 = sand.u32 %s27, 1
          %s184 = scalar_lea.sflag [#allocation3], %s183
          %s185 = sand.u32 %s27, 1
          %s186 = smul.addr %s185, 16
          %s187 = scalar_lea.vmem [#allocation2], %s186
          %s188 = smul.u32 2, %s17
          %190 = vsyncadd %s184, 0
          %s191 = smul.addr %s188, 8
          %s192 = scalar_lea.hbm %s0, %s191
          %s193 = sshll.u32 %s192, 4
          %s194 = int_to_ptr.hbm [resolvable:$true] %s193
          %s195 = sshll.u32 %s187, 4
          %s196 = int_to_ptr.vmem [resolvable:$true] %s195
          %201 = dma.hbm_to_vmem [thread:$0]  %s194, 256, %s196, %s184, 128, 128, 8
        $region32: #{tpu_custom_call.1} parent=27 // pred_fallthru
          _
      $region28: #{tpu_custom_call.1} parent=5 // pred_fallthru
        _
      %p202 = scmp.le.s32.totalorder 1, %s17
      %p203 = scmp.lt.s32.totalorder %s17, 9
      %p204 = pnand %p202, %p203
      %p205 = pneg %p204
      // Predicated region
      $region33: #{tpu_custom_call.1} parent=5 // pred_check
        _
      $region34: #{tpu_custom_call.1} parent=5 // pred_check_branch
        %207 = sbr.rel (%p204) target = $region36
      $region35: #{tpu_custom_call.1} parent=5 // pred_region
        %s208 = ssub.s32 %s17, 1
        %s209 = sand.u32 %s30, 1
        %s210 = scalar_lea.sflag [#allocation3], %s209
        %s211 = sand.u32 %s30, 1
        %s212 = smul.addr %s211, 16
        %s213 = scalar_lea.vmem [#allocation2], %s212
        // Predicated region
        $region37: #{tpu_custom_call.1} parent=35 // pred_check
          %p214 = pneg %p43
        $region38: #{tpu_custom_call.1} parent=35 // pred_check_branch
          %216 = sbr.rel (%p214) target = $region40
        $region39: #{tpu_custom_call.1} parent=35 // pred_region
          %218 = dma.done %s210, 256
        $region40: #{tpu_custom_call.1} parent=35 // pred_fallthru
          _
        // Predicated region
        $region41: #{tpu_custom_call.1} parent=35 // pred_check
          %p219 = pneg %p64
        $region42: #{tpu_custom_call.1} parent=35 // pred_check_branch
          %221 = sbr.rel (%p219) target = $region44
        $region43: #{tpu_custom_call.1} parent=35 // pred_region
          %223 = dma.done [#allocation6], 16
        $region44: #{tpu_custom_call.1} parent=35 // pred_fallthru
          _
        // Predicated region
        $region45: #{tpu_custom_call.1} parent=35 // pred_check
          %p224 = pneg %p106
        $region46: #{tpu_custom_call.1} parent=35 // pred_check_branch
          %226 = sbr.rel (%p224) target = $region48
        $region47: #{tpu_custom_call.1} parent=35 // pred_region
          %228 = dma.done [#allocation6], 1024
        $region48: #{tpu_custom_call.1} parent=35 // pred_fallthru
          _
        %s229 = sand.u32 %s30, 1
        %s230 = scalar_lea.sflag [#allocation3], %s229
        %s231 = sand.u32 %s30, 1
        %s232 = smul.addr %s231, 16
        %s233 = scalar_lea.vmem [#allocation2], %s232
        %p234 = pneg %p43
        %p235 = pneg %p40
        %p236 = pneg %p64
        %p237 = pneg %p61
        %p238 = pneg %p85
        %p239 = pneg %p82
        %p240 = pneg %p106
        %p241 = pneg %p103
        %p242 = pneg %p132
        %p243 = pneg %p129
        %s244 = sand.u32 %s119, 1
        %s245 = scalar_lea.sflag [#allocation4], %s244
        %s246 = sand.u32 %s119, 1
        %s247 = smul.addr %s246, 16
        %s248 = scalar_lea.vmem [#allocation8], %s247
        %s249 = smul.u32 2, %s22
        %s250 = smul.u32 2, %s22
        %v251 = vld [vmem:[%s213] sm:$0xff]
        %v252 = vld [vmem:[%s213 + $0x8] sm:$0xff]
        %v253 = vld [vmem:[#allocation7] sm:$0xf]
        %v254 = vld [vmem:[#allocation7 + $0x4] sm:$0xf]
        %v255 = vld [vmem:[#allocation7 + $0x8] sm:$0xf]
        %v256 = vld [vmem:[#allocation7 + $0xc] sm:$0xf]
        %v257 = vld [vmem:[#allocation7 + $0x10] sm:$0xf]
        %v258 = vld [vmem:[#allocation7 + $0x14] sm:$0xf]
        %v259 = vld [vmem:[#allocation7 + $0x18] sm:$0xf]
        %v260 = vld [vmem:[#allocation7 + $0x1c] sm:$0xf]
        %v261 = vld [vmem:[#allocation7 + $0x20] sm:$0xf]
        %v262 = vld [vmem:[#allocation7 + $0x24] sm:$0xf]
        %v263 = vld [vmem:[#allocation7 + $0x28] sm:$0xf]
        %v264 = vld [vmem:[#allocation7 + $0x2c] sm:$0xf]
        %v265 = vld [vmem:[#allocation7 + $0x30] sm:$0xf]
        %v266 = vld [vmem:[#allocation7 + $0x34] sm:$0xf]
        %v267 = vld [vmem:[#allocation7 + $0x38] sm:$0xf]
        %v268 = vld [vmem:[#allocation7 + $0x3c] sm:$0xf]
        %v269 = vpack.c.bf16 %v251, %v251
        %v270 = vpack.c.bf16 %v252, %v252
        %v271 = vunpack.c.l.bf16 %v269
        %v272 = vunpack.c.l.bf16 %v270
        %v273 = vsub.f32 %v251, %v271
        %v274 = vsub.f32 %v252, %v272
        %v275 = vpack.c.bf16 %v274, %v273
        %v292 = vunpack.c.l.b16 %v253
        %v293 = vunpack.c.l.b16 %v254
        %v294 = vunpack.c.l.b16 %v255
        %v295 = vunpack.c.l.b16 %v256
        %v296 = vunpack.c.l.b16 %v257
        %v297 = vunpack.c.l.b16 %v258
        %v298 = vunpack.c.l.b16 %v259
        %v299 = vunpack.c.l.b16 %v260
        %v300 = vunpack.c.l.b16 %v261
        %v301 = vunpack.c.l.b16 %v262
        %v302 = vunpack.c.l.b16 %v263
        %v303 = vunpack.c.l.b16 %v264
        %v304 = vunpack.c.l.b16 %v265
        %v305 = vunpack.c.l.b16 %v266
        %v306 = vunpack.c.l.b16 %v267
        %v307 = vunpack.c.l.b16 %v268
        %v308 = vpack.c.b16 %v293, %v292
        %v309 = vpack.c.b16 %v295, %v294
        %v310 = vpack.c.b16 %v297, %v296
        %v311 = vpack.c.b16 %v299, %v298
        %v312 = vpack.c.b16 %v301, %v300
        %v313 = vpack.c.b16 %v303, %v302
        %v314 = vpack.c.b16 %v305, %v304
        %v315 = vpack.c.b16 %v307, %v306
        %324 = vmatpush.bf16.msra.mxu0 %v315
        %325 = vmatpush.bf16.msra.mxu0 %v314
        %326 = vmatpush.bf16.msra.mxu0 %v313
        %327 = vmatpush.bf16.msra.mxu0 %v312
        %328 = vmatpush.bf16.msra.mxu0 %v311
        %329 = vmatpush.bf16.msra.mxu0 %v310
        %330 = vmatpush.bf16.msra.mxu0 %v309
        %331 = vmatpush.bf16.msra.mxu0 %v308
        %332 = vmatmul.bf16.gmra.mxu0 %v275
        %v333 = vpop.f32.mrf.mxu0
        %v334 = vadd.f32 0.0, %v333
        %v335 = vpop.f32.mrf.mxu0
        %v336 = vadd.f32 0.0, %v335
        %337 = vdwg.mxu0
        %v340 = vunpack.c.l.b16 %v269
        %v341 = vunpack.c.l.b16 %v270
        %v342 = vpack.c.b16 %v341, %v340
        %344 = vmatpush.bf16.msra.mxu0 %v315
        %345 = vmatpush.bf16.msra.mxu0 %v314
        %346 = vmatpush.bf16.msra.mxu0 %v313
        %347 = vmatpush.bf16.msra.mxu0 %v312
        %348 = vmatpush.bf16.msra.mxu0 %v311
        %349 = vmatpush.bf16.msra.mxu0 %v310
        %350 = vmatpush.bf16.msra.mxu0 %v309
        %351 = vmatpush.bf16.msra.mxu0 %v308
        %352 = vmatmul.bf16.gmra.mxu0 %v342
        %v353 = vpop.f32.mrf.mxu0
        %v354 = vadd.f32 %v334, %v353
        %v355 = vpop.f32.mrf.mxu0
        %v356 = vadd.f32 %v336, %v355
        %357 = vdwg.mxu0
        %v358 = vmul.f32 %v354, 0.03125
        %v359 = vmul.f32 %v356, 0.03125
        %v360 = vsub.f32 %v251, %v358
        %v361 = vsub.f32 %v252, %v359
        %v362 = vmul.f32 %v360, %v360
        %v363 = vmul.f32 %v361, %v361
        %v364 = vpack.c.bf16 %v362, %v362
        %v365 = vpack.c.bf16 %v363, %v363
        %v366 = vunpack.c.l.bf16 %v364
        %v367 = vunpack.c.l.bf16 %v365
        %v368 = vsub.f32 %v362, %v366
        %v369 = vsub.f32 %v363, %v367
        %v370 = vpack.c.bf16 %v369, %v368
        %371 = vmatpush.bf16.msra.mxu0 %v315
        %372 = vmatpush.bf16.msra.mxu0 %v314
        %373 = vmatpush.bf16.msra.mxu0 %v313
        %374 = vmatpush.bf16.msra.mxu0 %v312
        %375 = vmatpush.bf16.msra.mxu0 %v311
        %376 = vmatpush.bf16.msra.mxu0 %v310
        %377 = vmatpush.bf16.msra.mxu0 %v309
        %378 = vmatpush.bf16.msra.mxu0 %v308
        %379 = vmatmul.bf16.gmra.mxu0 %v370
        %v380 = vpop.f32.mrf.mxu0
        %v381 = vadd.f32 0.0, %v380
        %v382 = vpop.f32.mrf.mxu0
        %v383 = vadd.f32 0.0, %v382
        %384 = vdwg.mxu0
        %v387 = vunpack.c.l.b16 %v364
        %v388 = vunpack.c.l.b16 %v365
        %v389 = vpack.c.b16 %v388, %v387
        %391 = vmatpush.bf16.msra.mxu0 %v315
        %392 = vmatpush.bf16.msra.mxu0 %v314
        %393 = vmatpush.bf16.msra.mxu0 %v313
        %394 = vmatpush.bf16.msra.mxu0 %v312
        %395 = vmatpush.bf16.msra.mxu0 %v311
        %396 = vmatpush.bf16.msra.mxu0 %v310
        %397 = vmatpush.bf16.msra.mxu0 %v309
        %398 = vmatpush.bf16.msra.mxu0 %v308
        %399 = vmatmul.bf16.gmra.mxu0 %v389
        %v400 = vpop.f32.mrf.mxu0
        %v401 = vadd.f32 %v381, %v400
        %v402 = vpop.f32.mrf.mxu0
        %v403 = vadd.f32 %v383, %v402
        %404 = vdwg.mxu0
        %v405 = vmul.f32 %v401, 0.03125
        %v406 = vmul.f32 %v403, 0.03125
        %v407 = vmax.f32 %v405, 0.0
        %v408 = vmax.f32 %v406, 0.0
        %v409 = vadd.f32 %v407, 1e-05
        %v410 = vadd.f32 %v408, 1e-05
        %v411 = vrsqrt.pop %v409
        %v412 = vmul.f32 %v411, %v409
        %v413 = vmul.f32 %v412, %v411
        %v414 = vmul.f32 0.5, %v413
        %v415 = vsub.f32 1.5, %v414
        %v416 = vmul.f32 %v411, %v415
        %vm417 = vweird.f32 %v409
        %vm418 = vweird.f32 %v411
        %vm419 = vmor %vm417, %vm418
        %v420 = vsel %vm419, %v411, %v416
        %v421 = vrsqrt.pop %v410
        %v422 = vmul.f32 %v421, %v410
        %v423 = vmul.f32 %v422, %v421
        %v424 = vmul.f32 0.5, %v423
        %v425 = vsub.f32 1.5, %v424
        %v426 = vmul.f32 %v421, %v425
        %vm427 = vweird.f32 %v410
        %vm428 = vweird.f32 %v421
        %vm429 = vmor %vm427, %vm428
        %v430 = vsel %vm429, %v421, %v426
        %v431 = vmul.f32 %v360, %v420
        %v432 = vmul.f32 %v361, %v430
        %v433 = vld [vmem:[#allocation5] sm:$0x1]
        %v435 = vperm.slane %v433, 0
        %v437 = vmul.f32 %v431, %v435
        %v438 = vmul.f32 %v432, %v435
        %v439 = vld [vmem:[%s2] sm:$0x1]
        %v441 = vperm.slane %v439, 0
        %v443 = vadd.f32 %v437, %v441
        %v444 = vadd.f32 %v438, %v441
        %445 = vst [vmem:[%s248] sm:$0xff] %v443
        %446 = vst [vmem:[%s248 + $0x8] sm:$0xff] %v444
        %s447 = sand.u32 %s119, 1
        %s448 = scalar_lea.sflag [#allocation4], %s447
        %s449 = sand.u32 %s119, 1
        %s450 = smul.addr %s449, 16
        %s451 = scalar_lea.vmem [#allocation8], %s450
        // Predicated region
        $region49: #{tpu_custom_call.1} parent=35 // pred_check
          %p452 = pneg %p129
        $region50: #{tpu_custom_call.1} parent=35 // pred_check_branch
          %454 = sbr.rel (%p452) target = $region52
        $region51: #{tpu_custom_call.1} parent=35 // pred_region
          %s455 = smul.u32 2, %s22
          %457 = vsyncadd %s448, 0
          %s458 = smul.addr %s455, 8
          %s459 = scalar_lea.hbm %s4, %s458
          %s460 = sshll.u32 %s451, 4
          %s461 = int_to_ptr.vmem [resolvable:$true] %s460
          %s462 = sshll.u32 %s459, 4
          %s463 = int_to_ptr.hbm [resolvable:$true] %s462
          %468 = dma.vmem_to_hbm [thread:$0]  %s461, 256, %s463, %s448, 128, 128, 8
        $region52: #{tpu_custom_call.1} parent=35 // pred_fallthru
          _
      $region36: #{tpu_custom_call.1} parent=5 // pred_fallthru
        _
      %p469 = scmp.le.s32.totalorder 2, %s17
      // Predicated region
      $region53: #{tpu_custom_call.1} parent=5 // pred_check
        %p470 = pneg %p469
      $region54: #{tpu_custom_call.1} parent=5 // pred_check_branch
        %472 = sbr.rel (%p470) target = $region56
      $region55: #{tpu_custom_call.1} parent=5 // pred_region
        %s473 = ssub.s32 %s17, 2
        // Predicated region
        $region57: #{tpu_custom_call.1} parent=55 // pred_check
          %p474 = pneg %p135
        $region58: #{tpu_custom_call.1} parent=55 // pred_check_branch
          %476 = sbr.rel (%p474) target = $region60
        $region59: #{tpu_custom_call.1} parent=55 // pred_region
          %s477 = sand.u32 %s120, 1
          %s478 = scalar_lea.sflag [#allocation4], %s477
          %s479 = sand.u32 %s120, 1
          %s480 = smul.addr %s479, 16
          %s481 = scalar_lea.vmem [#allocation8], %s480
          %483 = dma.done %s478, 256
        $region60: #{tpu_custom_call.1} parent=55 // pred_fallthru
          _
      $region56: #{tpu_custom_call.1} parent=5 // pred_fallthru
        _
    $region6: #{tpu_custom_call.1} parent=1 // loop_footer
      %s21 = sadd.s32 1, %s17
    $region7: #{tpu_custom_call.1} parent=1 // loop_footer_branch
      %16 = sbr.rel target = $region3
    $region8: #{tpu_custom_call.1} parent=1 // loop_exit
      _
    %484 = vsyncpa [#allocation3], 1
    %s485 = scalar_lea.sflag [#allocation3], 1
    %486 = vsyncpa %s485, 1
    %487 = vsyncpa [#allocation6], 1
    %488 = vsyncpa [#allocation4], 1
    %s489 = scalar_lea.sflag [#allocation4], 1
    %490 = vsyncpa %s489, 1

</llo_original>
